<compile_context>
chip_gen: v7x
topology: tpu7x:2x2x1
jax: 0.10.0
libtpu: 0.0.40
codegen_flags: <defaults>
</compile_context>

<pallas_src>
import jax
import jax.numpy as jnp
from jax.experimental import pallas as pl
from jax.experimental.pallas import tpu as pltpu


def _symlog_kernel(x_ref, o_ref):
    x = x_ref[...]
    xf = x.astype(jnp.float32)
    y = jnp.log1p(jnp.abs(xf))          # = log(|x| + 1), better numerics near 0
    y = jnp.where(xf < 0, -y, y)        # restore sign; symlog(0) == 0
    o_ref[...] = y.astype(o_ref.dtype)


def _chip_params():
    """Per-generation (target_block_bytes, vmem_limit_bytes, is_v7x)."""
    kind = ""
    try:
        dev = jax.devices()[0]
        if dev.platform == "tpu":
            kind = dev.device_kind.lower()
    except Exception:
        pass
    if "v7" in kind or "7x" in kind:
        # 64 MiB physical VMEM per TC: 4 x 8 MiB buffers + headroom under 48.
        return 8 << 20, 48 << 20, True
    if "v6" in kind:
        # 128 MiB physical: plenty of headroom for 8 MiB buffers.
        return 8 << 20, 64 << 20, False
    if "v5e" in kind or "v5 lite" in kind or "v5lite" in kind:
        # ~0.8 TB/s HBM: 2-3 MiB buffers already amortize step overhead.
        return 3 << 20, 32 << 20, False
    # Unknown generation (v4, v5p, interpret, ...): conservative defaults.
    return 4 << 20, 40 << 20, False


def symlog_pallas(x: jax.Array, *, target_block_bytes: int | None = None,
                  donate_input: bool = False) -> jax.Array:
    """Elementwise symlog via Pallas. Works for any shape / float dtype."""
    orig_shape = x.shape
    dtype = x.dtype
    n = x.size
    if n == 0:
        return x

    itemsize = jnp.dtype(dtype).itemsize
    tbb, vmem_limit, is_v7x = _chip_params()
    if target_block_bytes is not None:
        tbb = target_block_bytes

    # Sublane packing multiple: 8 rows (f32), 16 (bf16/f16), 32 (8-bit).
    pack = 8 * max(1, 4 // min(itemsize, 4))

    # ---- 1) choose a lane-dense 2D view (prefer zero-copy, no pad/slice) ----
    x2d = None
    pad = 0
    lane_block = 128
    cols = 128
    rows = 1
    if n % 128 == 0:
        # Free reshape to (rows, lanes) with the widest dividing lane width.
        for cand in (1024, 512, 256, 128):
            if n % cand == 0:
                lane_block = cand
                break
        cols = lane_block
        rows = n // cols
        x2d = x.reshape(rows, cols)
    elif x.ndim >= 2 and int(orig_shape[-1]) >= 128:
        # Free reshape to (leading, last); ragged lane block rounded up to a
        # 128 multiple.  Pallas clamps the ragged block on load/store, so no
        # pad and no trailing slice (no extra HBM passes).
        cols = int(orig_shape[-1])
        lb = ((cols + 127) // 128) * 128
        if lb * itemsize * pack <= tbb:
            lane_block = lb
            rows = n // cols
            x2d = x.reshape(rows, cols)
    if x2d is None:
        # Rare fallback (odd total count with a tiny trailing dim): minimal pad
        # to a multiple of 128.  Costs one extra HBM pass each way.
        # TODO(synk): a tail-split via manual DMA would avoid the pad/slice.
        lane_block = 128
        cols = 128
        pad = (-n) % 128
        x_flat = x.reshape(-1)
        if pad:
            x_flat = jnp.pad(x_flat, (0, pad))
        rows = x_flat.size // 128
        x2d = x_flat.reshape(rows, cols)

    # ---- 2) row-tile sizing: ~tbb bytes per buffer, dtype-packed rows -------
    bytes_per_block_row = lane_block * itemsize
    tr = max(pack, ((tbb // bytes_per_block_row) // pack) * pack)
    if tr >= rows:
        # Small input: one block covering the full array (full-dim block is
        # always a legal block shape, even if not a multiple of `pack`).
        tr = rows
    elif is_v7x and pl.cdiv(rows, tr) < 4:
        # v7x only (2 TensorCores): keep >= 4 grid steps so
        # dimension_semantics=("parallel",) can shard across both cores.
        tr = max(pack, ((pl.cdiv(rows, 4) + pack - 1) // pack) * pack)
    grid = (pl.cdiv(rows, tr),)

    out2d = pl.pallas_call(
        _symlog_kernel,
        out_shape=jax.ShapeDtypeStruct((rows, cols), dtype),
        grid=grid,
        in_specs=[pl.BlockSpec((tr, lane_block), lambda i: (i, 0))],
        out_specs=pl.BlockSpec((tr, lane_block), lambda i: (i, 0)),
        compiler_params=pltpu.CompilerParams(
            dimension_semantics=("parallel",),
            vmem_limit_bytes=vmem_limit,
        ),
        cost_estimate=pl.CostEstimate(
            flops=3 * n, transcendentals=n, bytes_accessed=2 * n * itemsize),
        input_output_aliases=({0: 0} if donate_input else {}),
    )(x2d)

    out_flat = out2d.reshape(-1)
    if pad:
        out_flat = out_flat[:n]
    return out_flat.reshape(orig_shape)


def _symlog_ref(x):
    return jnp.sign(x) * jnp.log(jnp.abs(x) + 1.0)


if __name__ == "__main__":
    key = jax.random.PRNGKey(0)
    k0, k1, k2, k3 = jax.random.split(key, 4)

    # 1) Small NCHW-style input (main zero-copy path, n % 1024 == 0).
    x = jax.random.normal(k0, (2, 4, 16, 16), dtype=jnp.float32) * 5.0
    out = jax.block_until_ready(symlog_pallas(x))
    ref = _symlog_ref(x)
    assert out.shape == x.shape and out.dtype == x.dtype
    assert jnp.allclose(out, ref, atol=1e-5, rtol=1e-5)

    # 2) Unaligned trailing dim >= 128 (ragged lane block, no pad/slice).
    x2 = jax.random.normal(k1, (16, 300), dtype=jnp.float32) * 3.0
    out2 = jax.block_until_ready(symlog_pallas(x2))
    ref2 = _symlog_ref(x2)
    assert out2.shape == x2.shape and out2.dtype == x2.dtype
    assert jnp.allclose(out2, ref2, atol=1e-5, rtol=1e-5)

    # 3) Truly awkward size (minimal pad-to-128 fallback).
    x3 = jax.random.normal(k2, (3, 5, 7), dtype=jnp.float32) * 3.0
    out3 = jax.block_until_ready(symlog_pallas(x3))
    ref3 = _symlog_ref(x3)
    assert out3.shape == x3.shape and out3.dtype == x3.dtype
    assert jnp.allclose(out3, ref3, atol=1e-5, rtol=1e-5)

    # 4) bf16 input (16-row sublane packing; half the HBM traffic).
    x4 = (jax.random.normal(k3, (8, 32, 16), dtype=jnp.float32) * 5.0).astype(jnp.bfloat16)
    out4 = jax.block_until_ready(symlog_pallas(x4))
    ref4 = _symlog_ref(x4.astype(jnp.float32))
    assert out4.shape == x4.shape and out4.dtype == x4.dtype
    assert jnp.allclose(out4.astype(jnp.float32), ref4, atol=3e-2, rtol=2e-2)

    print("KERNEL_OK")
</pallas_src>

<mosaic_0001>
module attributes {stable_mosaic.version = 11 : i64} {
  func.func @_symlog_kernel(%arg0: i32, %arg1: memref<2x1024xf32, #tpu.memory_space<vmem>>, %arg2: memref<2x1024xf32, #tpu.memory_space<vmem>>) attributes {dimension_semantics = [#tpu.dimension_semantics<parallel>], iteration_bounds = array<i64: 1>, scalar_prefetch = 0 : i64, scratch_operands = 0 : i64, tpu.core_type = #tpu.core_type<tc>, window_params = [{transform_indices = @transform_0, window_bounds = array<i64: 2, 1024>}, {transform_indices = @transform_1, window_bounds = array<i64: 2, 1024>}]} {
    %c0 = arith.constant 0 : index
    %c0_0 = arith.constant 0 : index
    %0 = vector.load %arg1[%c0, %c0_0] : memref<2x1024xf32, #tpu.memory_space<vmem>>, vector<2x1024xf32>
    %1 = math.absf %0 : vector<2x1024xf32>
    %2 = math.log1p %1 : vector<2x1024xf32>
    %cst = arith.constant 0.000000e+00 : f32
    %3 = vector.broadcast %cst : f32 to vector<2x1024xf32>
    %4 = arith.cmpf olt, %0, %3 : vector<2x1024xf32>
    %cst_1 = arith.constant 0.000000e+00 : f32
    %5 = vector.broadcast %cst_1 : f32 to vector<2x1024xf32>
    %6 = arith.subf %5, %2 : vector<2x1024xf32>
    %7 = arith.select %4, %6, %2 : vector<2x1024xi1>, vector<2x1024xf32>
    %c0_2 = arith.constant 0 : index
    %c0_3 = arith.constant 0 : index
    %8 = vector.load %arg2[%c0_2, %c0_3] : memref<2x1024xf32, #tpu.memory_space<vmem>>, vector<2x1024xf32>
    tpu.vector_store %arg2[%c0_2, %c0_3], %7 {strides = array<i32>} : memref<2x1024xf32, #tpu.memory_space<vmem>>, vector<2x1024xf32>,
    return
  }
  func.func @transform_0(%arg0: i32) -> (i32, i32) {
    %c0_i32 = arith.constant 0 : i32
    %c0_i32_0 = arith.constant 0 : i32
    return %arg0, %c0_i32 : i32, i32
  }
  func.func @transform_1(%arg0: i32) -> (i32, i32) {
    %c0_i32 = arith.constant 0 : i32
    %c0_i32_0 = arith.constant 0 : i32
    return %arg0, %c0_i32 : i32, i32
  }
}

</mosaic_0001>

<llo_original>
// kernel: tpu_custom_call.1
$region0: #{tpu_custom_call.1}
  #allocation0 [shape = 'u32[]', space=smem, size = 0x4, offset = 0x4, fixed_abs, tag = 'smem constant byte address 0x4 - core index']
  #allocation1 [shape = 'u32[144,128]{1,0:T(1,128)}', space=vmem, size = 0x12000, scoped, tag = 'internal scratch']
  %s0 = inlined_call_operand.hbm [shape: f32[2,1024], index: 0, kind: input, shape index: {}]
  %s1 = inlined_call_operand.hbm [shape: f32[2,1024], index: 1, kind: output, shape index: {}]
  %s2 = sld [smem:[#allocation0]]
  $region18: #{tpu_custom_call.1} parent=0
    _
  %s4 = ssub.s32 1, %s2
  %s5 = scalar_select 0, %s4, %s2
  $region1: #{tpu_custom_call.1} parent=0
    #allocation2 [shape = 'u8[8192]{0}', space=vmem, size = 0x2000, scoped, tag = 'input window, operand 0, single buffered']
    #allocation3 [shape = 's32[1]{0}', space=sflag, size = 0x4, scoped, tag = 'scoped memory for tpu_custom_call.1']
    #allocation4 [shape = 's32[1]{0}', space=sflag, size = 0x4, scoped, tag = 'scoped memory for tpu_custom_call.1']
    #allocation5 [shape = 'u8[8192]{0}', space=vmem, size = 0x2000, scoped, tag = 'output window, operand 0, single buffered']
    %6 = vsyncpa [#allocation3], 0
    %7 = vsyncpa [#allocation4], 0
    // Predicated region
    $region2: #{tpu_custom_call.1} parent=1 // pred_check
      _
    $region3: #{tpu_custom_call.1} parent=1 // pred_check_branch
      %9 = sbr.rel (0) target = $region5
    $region4: #{tpu_custom_call.1} parent=1 // pred_region
      %s11 = ssub.s32 256, 256
      %12 = vsyncadd [#allocation3], %s11
      %s14 = sshll.u32 [#allocation2], 4
      %s15 = int_to_ptr.vmem [resolvable:$true] %s14
      %17 = dma.hbm_to_vmem [thread:$0]  %s0, 256, %s15, [#allocation3]
    $region5: #{tpu_custom_call.1} parent=1 // pred_fallthru
      _
    // Predicated region
    $region6: #{tpu_custom_call.1} parent=1 // pred_check
      _
    $region7: #{tpu_custom_call.1} parent=1 // pred_check_branch
      %19 = sbr.rel (0) target = $region9
    $region8: #{tpu_custom_call.1} parent=1 // pred_region
      %20 = dma.done [#allocation3], 256
    $region9: #{tpu_custom_call.1} parent=1 // pred_fallthru
      _
    %v21 = vld [vmem:[#allocation2] sm:$0xff]
    %v22 = vld [vmem:[#allocation2 + $0x8] sm:$0xff]
    %v23 = vand.u32 2147483647, %v21
    %v24 = vand.u32 2147483647, %v22
    %v25 = vadd.f32 %v23, 1.0
    %v26 = vlog2.pop %v25
    %v27 = vmul.f32 %v26, 0.6931472
    %v28 = vmul.f32 -0.5, %v23
    %v29 = vadd.f32 %v28, 1.0
    %v30 = vmul.f32 %v29, %v23
    %v31 = vand.u32 2147483647, %v23
    %vm32 = vcmp.lt.f32.partialorder %v31, 0.0004427343
    %v33 = vsel %vm32, %v30, %v27
    %v34 = vadd.f32 %v24, 1.0
    %v35 = vlog2.pop %v34
    %v36 = vmul.f32 %v35, 0.6931472
    %v37 = vmul.f32 -0.5, %v24
    %v38 = vadd.f32 %v37, 1.0
    %v39 = vmul.f32 %v38, %v24
    %v40 = vand.u32 2147483647, %v24
    %vm41 = vcmp.lt.f32.partialorder %v40, 0.0004427343
    %v42 = vsel %vm41, %v39, %v36
    %vm43 = vcmp.lt.f32.partialorder %v21, 0.0
    %vm44 = vcmp.lt.f32.partialorder %v22, 0.0
    %v45 = vsub.f32 0.0, %v33
    %v46 = vsub.f32 0.0, %v42
    %v47 = vsel %vm43, %v45, %v33
    %v48 = vsel %vm44, %v46, %v42
    %49 = vst [vmem:[#allocation5] sm:$0xff] %v47
    %50 = vst [vmem:[#allocation5 + $0x8] sm:$0xff] %v48
    // Predicated region
    $region10: #{tpu_custom_call.1} parent=1 // pred_check
      _
    $region11: #{tpu_custom_call.1} parent=1 // pred_check_branch
      %52 = sbr.rel (0) target = $region13
    $region12: #{tpu_custom_call.1} parent=1 // pred_region
      %s54 = ssub.s32 256, 256
      %55 = vsyncadd [#allocation4], %s54
      %s57 = sshll.u32 [#allocation5], 4
      %s58 = int_to_ptr.vmem [resolvable:$true] %s57
      %60 = dma.vmem_to_hbm [thread:$0]  %s58, 256, %s1, [#allocation4]
    $region13: #{tpu_custom_call.1} parent=1 // pred_fallthru
      _
    // Predicated region
    $region14: #{tpu_custom_call.1} parent=1 // pred_check
      _
    $region15: #{tpu_custom_call.1} parent=1 // pred_check_branch
      %62 = sbr.rel (0) target = $region17
    $region16: #{tpu_custom_call.1} parent=1 // pred_region
      %63 = dma.done [#allocation4], 256
    $region17: #{tpu_custom_call.1} parent=1 // pred_fallthru
      _
    %64 = vsyncpa [#allocation3], 1
    %65 = vsyncpa [#allocation4], 1

</llo_original>
